<compile_context>
chip_gen: v5e
topology: v5e:2x2
jax: 0.10.0
libtpu: 0.0.40
codegen_flags: <defaults>
</compile_context>

<pallas_src>
import functools

import jax
import jax.numpy as jnp
from jax.experimental import pallas as pl
from jax.experimental.pallas import tpu as pltpu


def _round_up(n, m):
    return ((n + m - 1) // m) * m


def generative_net_kernel(
    zy_ref,                # (tb, z_dim + y_dim)                  f32 input tile
    w_a_ref, b_a_ref,      # (z_dim+y_dim, 2*z_dim+64) bf16 ; (1, 2*z_dim+64) f32
    w_b_ref, b_b_ref,      # (2*z_dim+64, 64)          bf16 ; (1, 64)          f32
    w_c_ref, b_c_ref,      # (64, 128)                 bf16 ; (1, 128)         f32
    w_d_ref, b_d_ref,      # (128, OUT_W)              bf16 ; (1, OUT_W)       f32
    out_ref,               # (tb, OUT_W) f32 packed slab [y_mu | y_var | rot | force | pad]
    *, z_dim,
):
    out_w = out_ref.shape[1]

    # ---- layer A (fused): [y_mu | y_var_pre | h_pre] = [z|y] @ W_A + b_A ----
    zy = zy_ref[...].astype(jnp.bfloat16)
    slab_a = jnp.dot(zy, w_a_ref[...], preferred_element_type=jnp.float32) + b_a_ref[...]

    # ---- layer B: x_f = sigmoid(relu(h) @ W_g2 + b_g2) ----
    # ReLU on the whole slab is safe: the yy lanes feed all-zero rows of W_B.
    h_relu = jnp.maximum(slab_a, 0.0).astype(jnp.bfloat16)
    x_f = jax.nn.sigmoid(
        jnp.dot(h_relu, w_b_ref[...], preferred_element_type=jnp.float32) + b_b_ref[...]
    ).astype(jnp.bfloat16)

    # ---- layer C (fused force/rot hidden): relu(x_f @ [W_f1 | W_r1] + [b_f1 | b_r1]) ----
    h_fr = jnp.maximum(
        jnp.dot(x_f, w_c_ref[...], preferred_element_type=jnp.float32) + b_c_ref[...],
        0.0,
    ).astype(jnp.bfloat16)

    # ---- layer D: block-placed projection; rot -> lanes [2z, 2z+4), force -> [2z+4, 2z+7) ----
    fr = jnp.dot(h_fr, w_d_ref[...], preferred_element_type=jnp.float32) + b_d_ref[...]

    # ---- lane-masked activations; no concatenate / cross-lane relayout ----
    lane = jax.lax.broadcasted_iota(jnp.int32, fr.shape, 1)
    yy_mask = lane < 2 * z_dim
    sp_mask = (lane >= z_dim) & (lane < 2 * z_dim)
    rot_mask = (lane >= 2 * z_dim) & (lane < 2 * z_dim + 4)
    frc_mask = (lane >= 2 * z_dim + 4) & (lane < 2 * z_dim + 7)

    # yy already sits at lanes [0, 2z) of slab_a; fr already sits at its final lanes.
    pre = jnp.where(yy_mask, slab_a[:, :out_w], fr)

    # F.normalize(dim=1): x / max(||x||, 1e-12) == x * rsqrt(max(||x||^2, 1e-24))
    rot_vals = jnp.where(rot_mask, pre, 0.0)
    inv_norm = jax.lax.rsqrt(
        jnp.maximum(jnp.sum(rot_vals * rot_vals, axis=1, keepdims=True), 1e-24))

    out = jnp.where(sp_mask, jnp.logaddexp(0.0, pre), pre)   # softplus on y_var lanes
    out = jnp.where(frc_mask, jax.nn.sigmoid(pre), out)      # sigmoid on force lanes
    out = jnp.where(rot_mask, pre * inv_norm, out)           # normalize rot lanes
    out_ref[...] = out


def init_params(key, x_dim, z_dim, y_dim, hidden_dim=64):
    """Deterministic PyTorch-Linear-like init (uniform +-1/sqrt(fan_in)).

    Weights stored as (in_features, out_features); biases as (1, out_features).
    """
    def linear(k, fan_in, fan_out):
        kw, kb = jax.random.split(k)
        bound = 1.0 / jnp.sqrt(fan_in)
        w = jax.random.uniform(kw, (fan_in, fan_out), jnp.float32, -bound, bound)
        b = jax.random.uniform(kb, (1, fan_out), jnp.float32, -bound, bound)
        return w, b

    keys = jax.random.split(key, 8)
    w_ymu, b_ymu = linear(keys[0], y_dim, z_dim)
    w_yvar, b_yvar = linear(keys[1], y_dim, z_dim)
    w_g1, b_g1 = linear(keys[2], z_dim, hidden_dim)
    w_g2, b_g2 = linear(keys[3], hidden_dim, hidden_dim)
    w_r1, b_r1 = linear(keys[4], hidden_dim, hidden_dim)
    w_r2, b_r2 = linear(keys[5], hidden_dim, 4)   # output_rot_dim = 4
    w_f1, b_f1 = linear(keys[6], hidden_dim, hidden_dim)
    w_f2, b_f2 = linear(keys[7], hidden_dim, 3)   # output_force_dim = 3
    return (w_ymu, b_ymu, w_yvar, b_yvar, w_g1, b_g1, w_g2, b_g2,
            w_r1, b_r1, w_r2, b_r2, w_f1, b_f1, w_f2, b_f2)


def _fuse_params(params, out_w):
    """Fold the 8 Linear layers into 4 block-diagonal / zero-padded bf16 weights."""
    (w_ymu, b_ymu, w_yvar, b_yvar, w_g1, b_g1, w_g2, b_g2,
     w_r1, b_r1, w_r2, b_r2, w_f1, b_f1, w_f2, b_f2) = params

    y_dim, z_dim = w_ymu.shape
    hidden = w_g1.shape[1]
    wa_w = 2 * z_dim + hidden

    # Layer A: [z | y] -> [y_mu | y_var_pre | h_pre]   (block-diagonal)
    w_a = jnp.zeros((z_dim + y_dim, wa_w), jnp.float32)
    w_a = w_a.at[:z_dim, 2 * z_dim:].set(w_g1)
    w_a = w_a.at[z_dim:, :z_dim].set(w_ymu)
    w_a = w_a.at[z_dim:, z_dim:2 * z_dim].set(w_yvar)
    b_a = jnp.concatenate([b_ymu, b_yvar, b_g1], axis=1)

    # Layer B: only the h lanes of slab_a feed W_g2; the yy lanes hit zero rows.
    w_b = jnp.zeros((wa_w, hidden), jnp.float32).at[2 * z_dim:, :].set(w_g2)
    b_b = b_g2

    # Layer C: fused force/rot hidden layers.
    w_c = jnp.concatenate([w_f1, w_r1], axis=1)          # (64, 128)
    b_c = jnp.concatenate([b_f1, b_r1], axis=1)          # (1, 128)

    # Layer D: place rot at lanes [2z, 2z+4) and force at [2z+4, 2z+7) of the output slab.
    w_d = jnp.zeros((2 * hidden, out_w), jnp.float32)
    w_d = w_d.at[:hidden, 2 * z_dim + 4:2 * z_dim + 7].set(w_f2)
    w_d = w_d.at[hidden:, 2 * z_dim:2 * z_dim + 4].set(w_r2)
    b_d = jnp.zeros((1, out_w), jnp.float32)
    b_d = b_d.at[:, 2 * z_dim:2 * z_dim + 4].set(b_r2)
    b_d = b_d.at[:, 2 * z_dim + 4:2 * z_dim + 7].set(b_f2)

    # bf16 MXU operands (f32 accumulation in-kernel); biases stay f32.
    bf = jnp.bfloat16
    return (w_a.astype(bf), b_a, w_b.astype(bf), b_b,
            w_c.astype(bf), b_c, w_d.astype(bf), b_d)


def generative_net_forward(z, y, params, *, tile_b=2048):
    """tile_b=2048 keeps the per-core working set ~3 MiB (safe for v7x's 64 MiB VMEM);
    it can be raised to 4096 on v5e/v6e to amortize per-grid-step overhead further."""
    B = z.shape[0]
    z_dim = params[0].shape[1]
    hidden = params[4].shape[1]
    out_w = _round_up(2 * z_dim + 7, 8)
    assert out_w <= 2 * z_dim + hidden  # prefix-slice of the layer-A slab must cover it

    fused = _fuse_params(params, out_w)

    # One input DMA stream: [z | y]; the block-diagonal layer-A weight consumes it directly.
    zy = jnp.concatenate([z, y], axis=1)
    in_dim = zy.shape[1]

    # Batch tiling without wrapper-level padding: >= 2 grid steps whenever possible so the
    # "parallel" axis shards across both v7x TensorCores; a ragged last block (when tb does
    # not divide B) is handled by Pallas edge-block masking (OOB rows are never written).
    if B <= 8:
        tb = B
    else:
        n_steps = max(2, pl.cdiv(B, tile_b))
        tb = _round_up(pl.cdiv(B, n_steps), 8)
    grid = (pl.cdiv(B, tb),)

    in_specs = [pl.BlockSpec((tb, in_dim), lambda i: (i, 0))]
    # Weights/biases: full arrays with constant index_maps -> grid-invariant, stay
    # VMEM-resident across all grid steps (tiny footprint, ~40 KiB in bf16).
    in_specs += [pl.BlockSpec(p.shape, lambda i: (0, 0)) for p in fused]

    kernel = functools.partial(generative_net_kernel, z_dim=z_dim)

    slab = pl.pallas_call(
        kernel,
        out_shape=jax.ShapeDtypeStruct((B, out_w), jnp.float32),
        grid=grid,
        in_specs=in_specs,
        out_specs=pl.BlockSpec((tb, out_w), lambda i: (i, 0)),
        compiler_params=pltpu.CompilerParams(
            dimension_semantics=("parallel",),
        ),
    )(zy, *fused)

    return {
        "y_mean": slab[:, :z_dim],
        "y_var": slab[:, z_dim:2 * z_dim],
        "rot": slab[:, 2 * z_dim:2 * z_dim + 4],
        "force": slab[:, 2 * z_dim + 4:2 * z_dim + 7],
    }


def generative_net_reference(z, y, params):
    """Pure-JAX f32 reference matching the PyTorch module."""
    (w_ymu, b_ymu, w_yvar, b_yvar, w_g1, b_g1, w_g2, b_g2,
     w_r1, b_r1, w_r2, b_r2, w_f1, b_f1, w_f2, b_f2) = params
    y_mu = y @ w_ymu + b_ymu
    y_var = jax.nn.softplus(y @ w_yvar + b_yvar)
    h = jnp.maximum(z @ w_g1 + b_g1, 0.0)
    x_f = jax.nn.sigmoid(h @ w_g2 + b_g2)
    f = jnp.maximum(x_f @ w_f1 + b_f1, 0.0)
    force = jax.nn.sigmoid(f @ w_f2 + b_f2)
    r = jnp.maximum(x_f @ w_r1 + b_r1, 0.0)
    r = r @ w_r2 + b_r2
    norm = jnp.sqrt(jnp.sum(r * r, axis=1, keepdims=True))
    rot = r / jnp.maximum(norm, 1e-12)
    return {"y_mean": y_mu, "y_var": y_var, "rot": rot, "force": force}


if __name__ == "__main__":
    # Small shapes consistent with the module's forward.
    B = 2
    x_dim = 16   # unused by forward (matches PyTorch module signature)
    z_dim = 8
    y_dim = 16

    key = jax.random.PRNGKey(0)
    k_z, k_y, k_p = jax.random.split(key, 3)

    z = jax.random.normal(k_z, (B, z_dim), dtype=jnp.float32)
    y = jax.random.normal(k_y, (B, y_dim), dtype=jnp.float32)
    params = init_params(k_p, x_dim, z_dim, y_dim)

    out = generative_net_forward(z, y, params)
    jax.block_until_ready(out)

    # Shape checks.
    assert out["y_mean"].shape == (B, z_dim)
    assert out["y_var"].shape == (B, z_dim)
    assert out["rot"].shape == (B, 4)
    assert out["force"].shape == (B, 3)

    # Numerical check against the f32 reference (tolerance relaxed for bf16 matmuls).
    ref = generative_net_reference(z, y, params)
    for name in ("y_mean", "y_var", "rot", "force"):
        assert jnp.allclose(out[name], ref[name], atol=5e-2, rtol=5e-2), name

    # Exercise the multi-step grid path (both v7x TensorCores) with an evenly-dividing batch.
    B2 = 48
    k_z2, k_y2 = jax.random.split(jax.random.PRNGKey(1))
    z2 = jax.random.normal(k_z2, (B2, z_dim), dtype=jnp.float32)
    y2 = jax.random.normal(k_y2, (B2, y_dim), dtype=jnp.float32)
    out2 = generative_net_forward(z2, y2, params)
    jax.block_until_ready(out2)
    ref2 = generative_net_reference(z2, y2, params)
    for name in ("y_mean", "y_var", "rot", "force"):
        assert jnp.allclose(out2[name], ref2[name], atol=5e-2, rtol=5e-2), name

    print("KERNEL_OK")
</pallas_src>

<mosaic_0001>
module attributes {stable_mosaic.version = 11 : i64} {
  func.func @generative_net_kernel(%arg0: i32, %arg1: memref<2x24xf32, #tpu.memory_space<vmem>>, %arg2: memref<24x80xbf16, #tpu.memory_space<vmem>>, %arg3: memref<1x80xf32, #tpu.memory_space<vmem>>, %arg4: memref<80x64xbf16, #tpu.memory_space<vmem>>, %arg5: memref<1x64xf32, #tpu.memory_space<vmem>>, %arg6: memref<64x128xbf16, #tpu.memory_space<vmem>>, %arg7: memref<1x128xf32, #tpu.memory_space<vmem>>, %arg8: memref<128x24xbf16, #tpu.memory_space<vmem>>, %arg9: memref<1x24xf32, #tpu.memory_space<vmem>>, %arg10: memref<2x24xf32, #tpu.memory_space<vmem>>) attributes {dimension_semantics = [#tpu.dimension_semantics<parallel>], iteration_bounds = array<i64: 1>, scalar_prefetch = 0 : i64, scratch_operands = 0 : i64, tpu.core_type = #tpu.core_type<tc>, window_params = [{transform_indices = @transform_0, window_bounds = array<i64: 2, 24>}, {pipeline_mode = #tpu.pipeline_mode<synchronous>, transform_indices = @transform_1, window_bounds = array<i64: 24, 80>}, {pipeline_mode = #tpu.pipeline_mode<synchronous>, transform_indices = @transform_2, window_bounds = array<i64: 1, 80>}, {pipeline_mode = #tpu.pipeline_mode<synchronous>, transform_indices = @transform_3, window_bounds = array<i64: 80, 64>}, {pipeline_mode = #tpu.pipeline_mode<synchronous>, transform_indices = @transform_4, window_bounds = array<i64: 1, 64>}, {pipeline_mode = #tpu.pipeline_mode<synchronous>, transform_indices = @transform_5, window_bounds = array<i64: 64, 128>}, {pipeline_mode = #tpu.pipeline_mode<synchronous>, transform_indices = @transform_6, window_bounds = array<i64: 1, 128>}, {pipeline_mode = #tpu.pipeline_mode<synchronous>, transform_indices = @transform_7, window_bounds = array<i64: 128, 24>}, {pipeline_mode = #tpu.pipeline_mode<synchronous>, transform_indices = @transform_8, window_bounds = array<i64: 1, 24>}, {transform_indices = @transform_9, window_bounds = array<i64: 2, 24>}]} {
    %c0 = arith.constant 0 : index
    %c0_0 = arith.constant 0 : index
    %0 = vector.load %arg1[%c0, %c0_0] : memref<2x24xf32, #tpu.memory_space<vmem>>, vector<2x24xf32>
    %1 = arith.truncf %0 : vector<2x24xf32> to vector<2x24xbf16>
    %c0_1 = arith.constant 0 : index
    %c0_2 = arith.constant 0 : index
    %2 = vector.load %arg2[%c0_1, %c0_2] : memref<24x80xbf16, #tpu.memory_space<vmem>>, vector<24x80xbf16>
    %cst = arith.constant dense<0.000000e+00> : vector<2x80xf32>
    %3 = tpu.matmul %1, %2, %cst {dimension_numbers = #tpu.dot_dimension_numbers<[1], [0], [0], [1], [0, 0, 1, 1], [], []>} : vector<2x24xbf16>, vector<24x80xbf16>, vector<2x80xf32> -> vector<2x80xf32>
    %c0_3 = arith.constant 0 : index
    %c0_4 = arith.constant 0 : index
    %4 = vector.load %arg3[%c0_3, %c0_4] : memref<1x80xf32, #tpu.memory_space<vmem>>, vector<1x80xf32>
    %5 = vector.broadcast %4 : vector<1x80xf32> to vector<2x80xf32>
    %6 = arith.addf %3, %5 : vector<2x80xf32>
    %cst_5 = arith.constant 0.000000e+00 : f32
    %7 = vector.broadcast %cst_5 : f32 to vector<2x80xf32>
    %8 = arith.maximumf %6, %7 : vector<2x80xf32>
    %9 = arith.truncf %8 : vector<2x80xf32> to vector<2x80xbf16>
    %c0_6 = arith.constant 0 : index
    %c0_7 = arith.constant 0 : index
    %10 = vector.load %arg4[%c0_6, %c0_7] : memref<80x64xbf16, #tpu.memory_space<vmem>>, vector<80x64xbf16>
    %cst_8 = arith.constant dense<0.000000e+00> : vector<2x64xf32>
    %11 = tpu.matmul %9, %10, %cst_8 {dimension_numbers = #tpu.dot_dimension_numbers<[1], [0], [0], [1], [0, 0, 1, 1], [], []>} : vector<2x80xbf16>, vector<80x64xbf16>, vector<2x64xf32> -> vector<2x64xf32>
    %c0_9 = arith.constant 0 : index
    %c0_10 = arith.constant 0 : index
    %12 = vector.load %arg5[%c0_9, %c0_10] : memref<1x64xf32, #tpu.memory_space<vmem>>, vector<1x64xf32>
    %13 = vector.broadcast %12 : vector<1x64xf32> to vector<2x64xf32>
    %14 = arith.addf %11, %13 : vector<2x64xf32>
    %15 = arith.negf %14 : vector<2x64xf32>
    %16 = math.exp %15 : vector<2x64xf32>
    %cst_11 = arith.constant 1.000000e+00 : f32
    %17 = vector.broadcast %cst_11 : f32 to vector<2x64xf32>
    %18 = arith.addf %17, %16 : vector<2x64xf32>
    %19 = arith.divf %17, %18 : vector<2x64xf32>
    %20 = arith.truncf %19 : vector<2x64xf32> to vector<2x64xbf16>
    %c0_12 = arith.constant 0 : index
    %c0_13 = arith.constant 0 : index
    %21 = vector.load %arg6[%c0_12, %c0_13] : memref<64x128xbf16, #tpu.memory_space<vmem>>, vector<64x128xbf16>
    %cst_14 = arith.constant dense<0.000000e+00> : vector<2x128xf32>
    %22 = tpu.matmul %20, %21, %cst_14 {dimension_numbers = #tpu.dot_dimension_numbers<[1], [0], [0], [1], [0, 0, 1, 1], [], []>} : vector<2x64xbf16>, vector<64x128xbf16>, vector<2x128xf32> -> vector<2x128xf32>
    %c0_15 = arith.constant 0 : index
    %c0_16 = arith.constant 0 : index
    %23 = vector.load %arg7[%c0_15, %c0_16] : memref<1x128xf32, #tpu.memory_space<vmem>>, vector<1x128xf32>
    %24 = vector.broadcast %23 : vector<1x128xf32> to vector<2x128xf32>
    %25 = arith.addf %22, %24 : vector<2x128xf32>
    %cst_17 = arith.constant 0.000000e+00 : f32
    %26 = vector.broadcast %cst_17 : f32 to vector<2x128xf32>
    %27 = arith.maximumf %25, %26 : vector<2x128xf32>
    %28 = arith.truncf %27 : vector<2x128xf32> to vector<2x128xbf16>
    %c0_18 = arith.constant 0 : index
    %c0_19 = arith.constant 0 : index
    %29 = vector.load %arg8[%c0_18, %c0_19] : memref<128x24xbf16, #tpu.memory_space<vmem>>, vector<128x24xbf16>
    %cst_20 = arith.constant dense<0.000000e+00> : vector<2x24xf32>
    %30 = tpu.matmul %28, %29, %cst_20 {dimension_numbers = #tpu.dot_dimension_numbers<[1], [0], [0], [1], [0, 0, 1, 1], [], []>} : vector<2x128xbf16>, vector<128x24xbf16>, vector<2x24xf32> -> vector<2x24xf32>
    %c0_21 = arith.constant 0 : index
    %c0_22 = arith.constant 0 : index
    %31 = vector.load %arg9[%c0_21, %c0_22] : memref<1x24xf32, #tpu.memory_space<vmem>>, vector<1x24xf32>
    %32 = vector.broadcast %31 : vector<1x24xf32> to vector<2x24xf32>
    %33 = arith.addf %30, %32 : vector<2x24xf32>
    %34 = tpu.iota {dimensions = array<i32: 1>} : vector<2x24xi32>
    %c16_i32 = arith.constant 16 : i32
    %35 = vector.broadcast %c16_i32 : i32 to vector<2x24xi32>
    %36 = arith.cmpi slt, %34, %35 : vector<2x24xi32>
    %c8_i32 = arith.constant 8 : i32
    %37 = vector.broadcast %c8_i32 : i32 to vector<2x24xi32>
    %38 = arith.cmpi sge, %34, %37 : vector<2x24xi32>
    %c16_i32_23 = arith.constant 16 : i32
    %39 = vector.broadcast %c16_i32_23 : i32 to vector<2x24xi32>
    %40 = arith.cmpi slt, %34, %39 : vector<2x24xi32>
    %41 = arith.andi %38, %40 : vector<2x24xi1>
    %c16_i32_24 = arith.constant 16 : i32
    %42 = vector.broadcast %c16_i32_24 : i32 to vector<2x24xi32>
    %43 = arith.cmpi sge, %34, %42 : vector<2x24xi32>
    %c20_i32 = arith.constant 20 : i32
    %44 = vector.broadcast %c20_i32 : i32 to vector<2x24xi32>
    %45 = arith.cmpi slt, %34, %44 : vector<2x24xi32>
    %46 = arith.andi %43, %45 : vector<2x24xi1>
    %c20_i32_25 = arith.constant 20 : i32
    %47 = vector.broadcast %c20_i32_25 : i32 to vector<2x24xi32>
    %48 = arith.cmpi sge, %34, %47 : vector<2x24xi32>
    %c23_i32 = arith.constant 23 : i32
    %49 = vector.broadcast %c23_i32 : i32 to vector<2x24xi32>
    %50 = arith.cmpi slt, %34, %49 : vector<2x24xi32>
    %51 = arith.andi %48, %50 : vector<2x24xi1>
    %52 = vector.extract_strided_slice %6 {offsets = [0, 0], sizes = [2, 24], strides = [1, 1]} : vector<2x80xf32> to vector<2x24xf32>
    %53 = arith.select %36, %52, %33 : vector<2x24xi1>, vector<2x24xf32>
    %cst_26 = arith.constant 0.000000e+00 : f32
    %54 = vector.broadcast %cst_26 : f32 to vector<2x24xf32>
    %55 = arith.select %46, %53, %54 : vector<2x24xi1>, vector<2x24xf32>
    %56 = arith.mulf %55, %55 : vector<2x24xf32>
    %cst_27 = arith.constant dense<0.000000e+00> : vector<2xf32>
    %57 = vector.multi_reduction <add>, %56, %cst_27 [1] : vector<2x24xf32> to vector<2xf32>
    %58 = vector.shape_cast %57 : vector<2xf32> to vector<2x1xf32>
    %cst_28 = arith.constant 1.000000e-24 : f32
    %59 = vector.broadcast %cst_28 : f32 to vector<2x1xf32>
    %60 = arith.maximumf %58, %59 : vector<2x1xf32>
    %61 = math.rsqrt %60 : vector<2x1xf32>
    %cst_29 = arith.constant 0.000000e+00 : f32
    %62 = vector.broadcast %cst_29 : f32 to vector<2x24xf32>
    %63 = arith.maximumf %62, %53 : vector<2x24xf32>
    %64 = vector.broadcast %cst_29 : f32 to vector<2x24xf32>
    %65 = arith.subf %64, %53 : vector<2x24xf32>
    %66 = arith.cmpf one, %65, %65 : vector<2x24xf32>
    %67 = vector.broadcast %cst_29 : f32 to vector<2x24xf32>
    %68 = arith.addf %67, %53 : vector<2x24xf32>
    %69 = math.absf %65 : vector<2x24xf32>
    %cst_30 = arith.constant 0.000000e+00 : f32
    %70 = vector.broadcast %cst_30 : f32 to vector<2x24xf32>
    %71 = arith.subf %70, %69 : vector<2x24xf32>
    %72 = math.exp %71 : vector<2x24xf32>
    %73 = math.log1p %72 : vector<2x24xf32>
    %74 = arith.addf %63, %73 : vector<2x24xf32>
    %75 = arith.select %66, %68, %74 : vector<2x24xi1>, vector<2x24xf32>
    %76 = arith.select %41, %75, %53 : vector<2x24xi1>, vector<2x24xf32>
    %77 = arith.negf %53 : vector<2x24xf32>
    %78 = math.exp %77 : vector<2x24xf32>
    %cst_31 = arith.constant 1.000000e+00 : f32
    %79 = vector.broadcast %cst_31 : f32 to vector<2x24xf32>
    %80 = arith.addf %79, %78 : vector<2x24xf32>
    %81 = arith.divf %79, %80 : vector<2x24xf32>
    %82 = arith.select %51, %81, %76 : vector<2x24xi1>, vector<2x24xf32>
    %83 = vector.broadcast %61 : vector<2x1xf32> to vector<2x24xf32>
    %84 = arith.mulf %53, %83 : vector<2x24xf32>
    %85 = arith.select %46, %84, %82 : vector<2x24xi1>, vector<2x24xf32>
    %c0_32 = arith.constant 0 : index
    %c0_33 = arith.constant 0 : index
    %86 = vector.load %arg10[%c0_32, %c0_33] : memref<2x24xf32, #tpu.memory_space<vmem>>, vector<2x24xf32>
    tpu.vector_store %arg10[%c0_32, %c0_33], %85 {strides = array<i32>} : memref<2x24xf32, #tpu.memory_space<vmem>>, vector<2x24xf32>,
    return
  }
  func.func @transform_0(%arg0: i32) -> (i32, i32) {
    %c0_i32 = arith.constant 0 : i32
    %c0_i32_0 = arith.constant 0 : i32
    return %arg0, %c0_i32 : i32, i32
  }
  func.func @transform_1(%arg0: i32) -> (i32, i32) {
    %c0_i32 = arith.constant 0 : i32
    %c0_i32_0 = arith.constant 0 : i32
    %c0_i32_1 = arith.constant 0 : i32
    return %c0_i32, %c0_i32_0 : i32, i32
  }
  func.func @transform_2(%arg0: i32) -> (i32, i32) {
    %c0_i32 = arith.constant 0 : i32
    %c0_i32_0 = arith.constant 0 : i32
    %c0_i32_1 = arith.constant 0 : i32
    return %c0_i32, %c0_i32_0 : i32, i32
  }
  func.func @transform_3(%arg0: i32) -> (i32, i32) {
    %c0_i32 = arith.constant 0 : i32
    %c0_i32_0 = arith.constant 0 : i32
    %c0_i32_1 = arith.constant 0 : i32
    return %c0_i32, %c0_i32_0 : i32, i32
  }
  func.func @transform_4(%arg0: i32) -> (i32, i32) {
    %c0_i32 = arith.constant 0 : i32
    %c0_i32_0 = arith.constant 0 : i32
    %c0_i32_1 = arith.constant 0 : i32
    return %c0_i32, %c0_i32_0 : i32, i32
  }
  func.func @transform_5(%arg0: i32) -> (i32, i32) {
    %c0_i32 = arith.constant 0 : i32
    %c0_i32_0 = arith.constant 0 : i32
    %c0_i32_1 = arith.constant 0 : i32
    return %c0_i32, %c0_i32_0 : i32, i32
  }
  func.func @transform_6(%arg0: i32) -> (i32, i32) {
    %c0_i32 = arith.constant 0 : i32
    %c0_i32_0 = arith.constant 0 : i32
    %c0_i32_1 = arith.constant 0 : i32
    return %c0_i32, %c0_i32_0 : i32, i32
  }
  func.func @transform_7(%arg0: i32) -> (i32, i32) {
    %c0_i32 = arith.constant 0 : i32
    %c0_i32_0 = arith.constant 0 : i32
    %c0_i32_1 = arith.constant 0 : i32
    return %c0_i32, %c0_i32_0 : i32, i32
  }
  func.func @transform_8(%arg0: i32) -> (i32, i32) {
    %c0_i32 = arith.constant 0 : i32
    %c0_i32_0 = arith.constant 0 : i32
    %c0_i32_1 = arith.constant 0 : i32
    return %c0_i32, %c0_i32_0 : i32, i32
  }
  func.func @transform_9(%arg0: i32) -> (i32, i32) {
    %c0_i32 = arith.constant 0 : i32
    %c0_i32_0 = arith.constant 0 : i32
    return %arg0, %c0_i32 : i32, i32
  }
}

</mosaic_0001>

<llo_original>
// kernel: tpu_custom_call.1
$region0: #{tpu_custom_call.1}
  #allocation0 [shape = 'u32[]', space=smem, size = 0x4, offset = 0x4, fixed_abs, tag = 'smem constant byte address 0x4 - core index']
  #allocation1 [shape = 'u32[72,128]{1,0:T(1,128)}', space=vmem, size = 0x9000, scoped, tag = 'internal scratch']
  %s0 = inlined_call_operand.vmem [shape: f32[2,24], index: 0, kind: input, shape index: {}]
  %s1 = inlined_call_operand.vmem [shape: bf16[24,80], index: 1, kind: input, shape index: {}]
  %s2 = inlined_call_operand.vmem [shape: f32[1,80], index: 2, kind: input, shape index: {}]
  %s3 = inlined_call_operand.vmem [shape: bf16[80,64], index: 3, kind: input, shape index: {}]
  %s4 = inlined_call_operand.vmem [shape: f32[1,64], index: 4, kind: input, shape index: {}]
  %s5 = inlined_call_operand.vmem [shape: bf16[64,128], index: 5, kind: input, shape index: {}]
  %s6 = inlined_call_operand.vmem [shape: f32[1,128], index: 6, kind: input, shape index: {}]
  %s7 = inlined_call_operand.vmem [shape: bf16[128,24], index: 7, kind: input, shape index: {}]
  %s8 = inlined_call_operand.vmem [shape: f32[1,24], index: 8, kind: input, shape index: {}]
  %s9 = inlined_call_operand.hbm [shape: f32[2,24], index: 9, kind: output, shape index: {}]
  %s10 = sld [smem:[#allocation0]]
  $region46: #{tpu_custom_call.1} parent=0
    _
  %s12 = ssub.s32 1, %s10
  %s13 = scalar_select 0, %s12, %s10
  $region1: #{tpu_custom_call.1} parent=0
    #allocation2 [shape = 'u8[1024]{0}', space=vmem, size = 0x400, scoped, tag = 'output window, operand 0, single buffered']
    #allocation3 [shape = 's32[1]{0}', space=sflag, size = 0x4, scoped, tag = 'scoped memory for tpu_custom_call.1']
    %14 = vsyncpa [#allocation3], 0
    // Predicated region
    $region2: #{tpu_custom_call.1} parent=1 // pred_check
      _
    $region3: #{tpu_custom_call.1} parent=1 // pred_check_branch
      %16 = sbr.rel (0) target = $region5
    $region4: #{tpu_custom_call.1} parent=1 // pred_region
      _
    $region5: #{tpu_custom_call.1} parent=1 // pred_fallthru
      _
    // Predicated region
    $region6: #{tpu_custom_call.1} parent=1 // pred_check
      _
    $region7: #{tpu_custom_call.1} parent=1 // pred_check_branch
      %18 = sbr.rel (0) target = $region9
    $region8: #{tpu_custom_call.1} parent=1 // pred_region
      _
    $region9: #{tpu_custom_call.1} parent=1 // pred_fallthru
      _
    // Predicated region
    $region10: #{tpu_custom_call.1} parent=1 // pred_check
      _
    $region11: #{tpu_custom_call.1} parent=1 // pred_check_branch
      %20 = sbr.rel (0) target = $region13
    $region12: #{tpu_custom_call.1} parent=1 // pred_region
      _
    $region13: #{tpu_custom_call.1} parent=1 // pred_fallthru
      _
    // Predicated region
    $region14: #{tpu_custom_call.1} parent=1 // pred_check
      _
    $region15: #{tpu_custom_call.1} parent=1 // pred_check_branch
      %22 = sbr.rel (0) target = $region17
    $region16: #{tpu_custom_call.1} parent=1 // pred_region
      _
    $region17: #{tpu_custom_call.1} parent=1 // pred_fallthru
      _
    // Predicated region
    $region18: #{tpu_custom_call.1} parent=1 // pred_check
      _
    $region19: #{tpu_custom_call.1} parent=1 // pred_check_branch
      %24 = sbr.rel (0) target = $region21
    $region20: #{tpu_custom_call.1} parent=1 // pred_region
      _
    $region21: #{tpu_custom_call.1} parent=1 // pred_fallthru
      _
    // Predicated region
    $region22: #{tpu_custom_call.1} parent=1 // pred_check
      _
    $region23: #{tpu_custom_call.1} parent=1 // pred_check_branch
      %26 = sbr.rel (0) target = $region25
    $region24: #{tpu_custom_call.1} parent=1 // pred_region
      _
    $region25: #{tpu_custom_call.1} parent=1 // pred_fallthru
      _
    // Predicated region
    $region26: #{tpu_custom_call.1} parent=1 // pred_check
      _
    $region27: #{tpu_custom_call.1} parent=1 // pred_check_branch
      %28 = sbr.rel (0) target = $region29
    $region28: #{tpu_custom_call.1} parent=1 // pred_region
      _
    $region29: #{tpu_custom_call.1} parent=1 // pred_fallthru
      _
    // Predicated region
    $region30: #{tpu_custom_call.1} parent=1 // pred_check
      _
    $region31: #{tpu_custom_call.1} parent=1 // pred_check_branch
      %30 = sbr.rel (0) target = $region33
    $region32: #{tpu_custom_call.1} parent=1 // pred_region
      _
    $region33: #{tpu_custom_call.1} parent=1 // pred_fallthru
      _
    // Predicated region
    $region34: #{tpu_custom_call.1} parent=1 // pred_check
      _
    $region35: #{tpu_custom_call.1} parent=1 // pred_check_branch
      %32 = sbr.rel (0) target = $region37
    $region36: #{tpu_custom_call.1} parent=1 // pred_region
      _
    $region37: #{tpu_custom_call.1} parent=1 // pred_fallthru
      _
    %v34 = vld [vmem:[%s0] sm:$0x3]
    %v35 = vpack.c.bf16 %v34, %v34
    %v36 = vld [vmem:[%s1] sm:$0xf]
    %v37 = vld [vmem:[%s1 + $0x4] sm:$0xf]
    %v38 = vld [vmem:[%s1 + $0x8] sm:$0xf]
    %v39 = vld [vmem:[%s2] sm:$0x1]
    %v41 = vperm.slane %v39, 0
    %v46 = vunpack.c.l.b16 %v36
    %v47 = vunpack.c.l.b16 %v37
    %v48 = vunpack.c.l.b16 %v38
    %v49 = vpack.c.b16 %v47, %v46
    %v50 = vpack.c.b16 %v48, %v48
    %vm52 = vcmask 195584
    %v54 = vsel %vm52, %v35, 0
    %vm56 = vcmask 1043456
    %v58 = vsel %vm56, %v50, 0
    %60 = vmatpush.bf16.msra.mxu0 0
    %61 = vmatpush.bf16.msra.mxu0 0
    %62 = vmatpush.bf16.msra.mxu0 0
    %63 = vmatpush.bf16.msra.mxu0 0
    %64 = vmatpush.bf16.msra.mxu0 0
    %65 = vmatpush.bf16.msra.mxu0 0
    %66 = vmatpush.bf16.msra.mxu0 %v58
    %67 = vmatpush.bf16.msra.mxu0 %v49
    %68 = vmatmul.bf16.gmra.mxu0 %v54
    %v69 = vpop.f32.mrf.mxu0
    %v70 = vadd.f32 %v41, %v69
    %v71 = vpop.f32.mrf.mxu0
    %72 = vdwg.mxu0
    %v73 = vmax.f32 %v70, 0.0
    %v74 = vpack.c.bf16 %v73, %v73
    %v75 = vld [vmem:[%s3] sm:$0xf]
    %v76 = vld [vmem:[%s3 + $0x4] sm:$0xf]
    %v77 = vld [vmem:[%s3 + $0x8] sm:$0xf]
    %v78 = vld [vmem:[%s3 + $0xc] sm:$0xf]
    %v79 = vld [vmem:[%s3 + $0x10] sm:$0xf]
    %v80 = vld [vmem:[%s3 + $0x14] sm:$0xf]
    %v81 = vld [vmem:[%s3 + $0x18] sm:$0xf]
    %v82 = vld [vmem:[%s3 + $0x1c] sm:$0xf]
    %v83 = vld [vmem:[%s3 + $0x20] sm:$0xf]
    %v84 = vld [vmem:[%s3 + $0x24] sm:$0xf]
    %v85 = vld [vmem:[%s4] sm:$0x1]
    %v87 = vperm.slane %v85, 0
    %v99 = vunpack.c.l.b16 %v75
    %v100 = vunpack.c.l.b16 %v76
    %v101 = vunpack.c.l.b16 %v77
    %v102 = vunpack.c.l.b16 %v78
    %v103 = vunpack.c.l.b16 %v79
    %v104 = vunpack.c.l.b16 %v80
    %v105 = vunpack.c.l.b16 %v81
    %v106 = vunpack.c.l.b16 %v82
    %v107 = vunpack.c.l.b16 %v83
    %v108 = vunpack.c.l.b16 %v84
    %v109 = vpack.c.b16 %v100, %v99
    %v110 = vpack.c.b16 %v102, %v101
    %v111 = vpack.c.b16 %v104, %v103
    %v112 = vpack.c.b16 %v106, %v105
    %v113 = vpack.c.b16 %v108, %v107
    %vm119 = vcmask 654336
    %v121 = vsel %vm119, %v74, 0
    %123 = vmatpush.bf16.msra.mxu0 0
    %124 = vmatpush.bf16.msra.mxu0 0
    %125 = vmatpush.bf16.msra.mxu0 0
    %126 = vmatpush.bf16.msra.mxu0 %v113
    %127 = vmatpush.bf16.msra.mxu0 %v112
    %128 = vmatpush.bf16.msra.mxu0 %v111
    %129 = vmatpush.bf16.msra.mxu0 %v110
    %130 = vmatpush.bf16.msra.mxu0 %v109
    %131 = vmatmul.bf16.gmra.mxu0 %v121
    %v132 = vpop.f32.mrf.mxu0
    %v133 = vadd.f32 %v87, %v132
    %v134 = vpop.f32.mrf.mxu0
    %135 = vdwg.mxu0
    %v136 = vxor.u32 %v133, 2147483648
    %v137 = vmul.f32 %v136, 1.442695
    %v138 = vpow.pop %v137
    %v139 = vadd.f32 %v138, 1.0
    %v140 = vrcp.pop %v139
    %v141 = vmul.f32 %v139, %v140
    %v142 = vsub.f32 1.0, %v141
    %v143 = vmul.f32 %v140, %v142
    %v144 = vadd.f32 %v140, %v143
    %vm145 = vweird.f32 %v139
    %vm146 = vweird.f32 %v140
    %vm147 = vmor %vm145, %vm146
    %v148 = vsel %vm147, %v140, %v144
    %v149 = vand.u32 2147483647, %v139
    %vm150 = vcmp.eq.f32.partialorder %v149, 8.507059e+37
    %v151 = vand.u32 %v139, 2147483648
    %v152 = vor.u32 1.1754944e-38, %v151
    %v153 = vsel %vm150, %v152, %v148
    %v154 = vmul.f32 1.0, %v153
    %v155 = vpack.c.bf16 %v154, %v154
    %v156 = vld [vmem:[%s5] sm:$0xf]
    %v157 = vld [vmem:[%s5 + $0x4] sm:$0xf]
    %v158 = vld [vmem:[%s5 + $0x8] sm:$0xf]
    %v159 = vld [vmem:[%s5 + $0xc] sm:$0xf]
    %v160 = vld [vmem:[%s5 + $0x10] sm:$0xf]
    %v161 = vld [vmem:[%s5 + $0x14] sm:$0xf]
    %v162 = vld [vmem:[%s5 + $0x18] sm:$0xf]
    %v163 = vld [vmem:[%s5 + $0x1c] sm:$0xf]
    %v164 = vld [vmem:[%s6] sm:$0x1]
    %v166 = vperm.slane %v164, 0
    %v176 = vunpack.c.l.b16 %v156
    %v177 = vunpack.c.l.b16 %v157
    %v178 = vunpack.c.l.b16 %v158
    %v179 = vunpack.c.l.b16 %v159
    %v180 = vunpack.c.l.b16 %v160
    %v181 = vunpack.c.l.b16 %v161
    %v182 = vunpack.c.l.b16 %v162
    %v183 = vunpack.c.l.b16 %v163
    %v184 = vpack.c.b16 %v177, %v176
    %v185 = vpack.c.b16 %v179, %v178
    %v186 = vpack.c.b16 %v181, %v180
    %v187 = vpack.c.b16 %v183, %v182
    %vm192 = vcmask 523264
    %v194 = vsel %vm192, %v155, 0
    %196 = vmatpush.bf16.msra.mxu0 0
    %197 = vmatpush.bf16.msra.mxu0 0
    %198 = vmatpush.bf16.msra.mxu0 0
    %199 = vmatpush.bf16.msra.mxu0 0
    %200 = vmatpush.bf16.msra.mxu0 %v187
    %201 = vmatpush.bf16.msra.mxu0 %v186
    %202 = vmatpush.bf16.msra.mxu0 %v185
    %203 = vmatpush.bf16.msra.mxu0 %v184
    %204 = vmatmul.bf16.gmra.mxu0 %v194
    %v205 = vpop.f32.mrf.mxu0
    %v206 = vadd.f32 %v166, %v205
    %v207 = vpop.f32.mrf.mxu0
    %208 = vdwg.mxu0
    %v209 = vmax.f32 %v206, 0.0
    %v210 = vpack.c.bf16 %v209, %v209
    %v211 = vld [vmem:[%s7] sm:$0xf]
    %v212 = vld [vmem:[%s7 + $0x4] sm:$0xf]
    %v213 = vld [vmem:[%s7 + $0x8] sm:$0xf]
    %v214 = vld [vmem:[%s7 + $0xc] sm:$0xf]
    %v215 = vld [vmem:[%s7 + $0x10] sm:$0xf]
    %v216 = vld [vmem:[%s7 + $0x14] sm:$0xf]
    %v217 = vld [vmem:[%s7 + $0x18] sm:$0xf]
    %v218 = vld [vmem:[%s7 + $0x1c] sm:$0xf]
    %v219 = vld [vmem:[%s7 + $0x20] sm:$0xf]
    %v220 = vld [vmem:[%s7 + $0x24] sm:$0xf]
    %v221 = vld [vmem:[%s7 + $0x28] sm:$0xf]
    %v222 = vld [vmem:[%s7 + $0x2c] sm:$0xf]
    %v223 = vld [vmem:[%s7 + $0x30] sm:$0xf]
    %v224 = vld [vmem:[%s7 + $0x34] sm:$0xf]
    %v225 = vld [vmem:[%s7 + $0x38] sm:$0xf]
    %v226 = vld [vmem:[%s7 + $0x3c] sm:$0xf]
    %v227 = vld [vmem:[%s8] sm:$0x1]
    %v229 = vperm.slane %v227, 0
    %v247 = vunpack.c.l.b16 %v211
    %v248 = vunpack.c.l.b16 %v212
    %v249 = vunpack.c.l.b16 %v213
    %v250 = vunpack.c.l.b16 %v214
    %v251 = vunpack.c.l.b16 %v215
    %v252 = vunpack.c.l.b16 %v216
    %v253 = vunpack.c.l.b16 %v217
    %v254 = vunpack.c.l.b16 %v218
    %v255 = vunpack.c.l.b16 %v219
    %v256 = vunpack.c.l.b16 %v220
    %v257 = vunpack.c.l.b16 %v221
    %v258 = vunpack.c.l.b16 %v222
    %v259 = vunpack.c.l.b16 %v223
    %v260 = vunpack.c.l.b16 %v224
    %v261 = vunpack.c.l.b16 %v225
    %v262 = vunpack.c.l.b16 %v226
    %v263 = vpack.c.b16 %v248, %v247
    %v264 = vpack.c.b16 %v250, %v249
    %v265 = vpack.c.b16 %v252, %v251
    %v266 = vpack.c.b16 %v254, %v253
    %v267 = vpack.c.b16 %v256, %v255
    %v268 = vpack.c.b16 %v258, %v257
    %v269 = vpack.c.b16 %v260, %v259
    %v270 = vpack.c.b16 %v262, %v261
    %279 = vmatpush.bf16.msra.mxu0 %v270
    %280 = vmatpush.bf16.msra.mxu0 %v269
    %281 = vmatpush.bf16.msra.mxu0 %v268
    %282 = vmatpush.bf16.msra.mxu0 %v267
    %283 = vmatpush.bf16.msra.mxu0 %v266
    %284 = vmatpush.bf16.msra.mxu0 %v265
    %285 = vmatpush.bf16.msra.mxu0 %v264
    %286 = vmatpush.bf16.msra.mxu0 %v263
    %287 = vmatmul.bf16.gmra.mxu0 %v210
    %v288 = vpop.f32.mrf.mxu0
    %v289 = vadd.f32 %v229, %v288
    %v290 = vpop.f32.mrf.mxu0
    %291 = vdwg.mxu0
    %v292 = vlaneseq
    %v293 = vand.u32 %v292, 127
    %vm294 = vcmp.lt.s32.totalorder %v293, 16
    %vm295 = vcmp.ge.s32.totalorder %v293, 8
    %vm296 = vmand %vm295, %vm294
    %vm297 = vcmp.ge.s32.totalorder %v293, 16
    %vm298 = vcmp.lt.s32.totalorder %v293, 20
    %vm299 = vmand %vm297, %vm298
    %vm300 = vcmp.ge.s32.totalorder %v293, 20
    %vm301 = vcmp.lt.s32.totalorder %v293, 23
    %vm302 = vmand %vm300, %vm301
    %v303 = vsel %vm294, %v70, %v289
    %v304 = vsel %vm299, %v303, 0.0
    %v305 = vmul.f32 %v304, %v304
    %vm306 = vcmask 189440
    %v307 = vsel %vm306, %v305, 0.0
    %308 = vadd.xlane.f32.xlu0 %v307
    %v309 = vpop.xlane.xlu0 %308
    %v310 = vmax.f32 %v309, 1e-24
    %v311 = vrsqrt.pop %v310
    %v312 = vmul.f32 %v311, %v310
    %v313 = vmul.f32 %v312, %v311
    %v314 = vmul.f32 0.5, %v313
    %v315 = vsub.f32 1.5, %v314
    %v316 = vmul.f32 %v311, %v315
    %vm317 = vweird.f32 %v310
    %vm318 = vweird.f32 %v311
    %vm319 = vmor %vm317, %vm318
    %v320 = vsel %vm319, %v311, %v316
    %v321 = vmax.f32 %v303, 0.0
    %v322 = vsub.f32 0.0, %v303
    %vm323 = vcmp.ne.f32.partialorder %v322, %v322
    %v324 = vadd.f32 %v303, 0.0
    %v325 = vand.u32 2147483647, %v322
    %v326 = vsub.f32 0.0, %v325
    %v327 = vmul.f32 %v326, 1.442695
    %v328 = vpow.pop %v327
    %v329 = vadd.f32 %v328, 1.0
    %v330 = vlog2.pop %v329
    %v331 = vmul.f32 %v330, 0.6931472
    %v332 = vmul.f32 -0.5, %v328
    %v333 = vadd.f32 %v332, 1.0
    %v334 = vmul.f32 %v333, %v328
    %v335 = vand.u32 2147483647, %v328
    %vm336 = vcmp.lt.f32.partialorder %v335, 0.0004427343
    %v337 = vsel %vm336, %v334, %v331
    %v338 = vadd.f32 %v321, %v337
    %v339 = vsel %vm323, %v324, %v338
    %v340 = vsel %vm296, %v339, %v303
    %v341 = vxor.u32 %v303, 2147483648
    %v342 = vmul.f32 %v341, 1.442695
    %v343 = vpow.pop %v342
    %v344 = vadd.f32 %v343, 1.0
    %v345 = vrcp.pop %v344
    %v346 = vmul.f32 %v344, %v345
    %v347 = vsub.f32 1.0, %v346
    %v348 = vmul.f32 %v345, %v347
    %v349 = vadd.f32 %v345, %v348
    %vm350 = vweird.f32 %v344
    %vm351 = vweird.f32 %v345
    %vm352 = vmor %vm350, %vm351
    %v353 = vsel %vm352, %v345, %v349
    %v354 = vand.u32 2147483647, %v344
    %vm355 = vcmp.eq.f32.partialorder %v354, 8.507059e+37
    %v356 = vand.u32 %v344, 2147483648
    %v357 = vor.u32 1.1754944e-38, %v356
    %v358 = vsel %vm355, %v357, %v353
    %v359 = vmul.f32 1.0, %v358
    %v360 = vsel %vm302, %v359, %v340
    %v361 = vmul.f32 %v303, %v320
    %v362 = vsel %vm299, %v361, %v360
    %363 = vst.msk [vmem:[#allocation2] sm:$0x3] %vm306, %v362
    // Predicated region
    $region38: #{tpu_custom_call.1} parent=1 // pred_check
      _
    $region39: #{tpu_custom_call.1} parent=1 // pred_check_branch
      %365 = sbr.rel (0) target = $region41
    $region40: #{tpu_custom_call.1} parent=1 // pred_region
      %367 = vsyncadd [#allocation3], 0
      %s369 = sshll.u32 [#allocation2], 4
      %s370 = int_to_ptr.vmem [resolvable:$true] %s369
      %s371 = sshll.u32 %s9, 4
      %s372 = int_to_ptr.hbm [resolvable:$true] %s371
      %374 = dma.vmem_to_hbm [thread:$0]  %s370, 32, %s372, [#allocation3]
    $region41: #{tpu_custom_call.1} parent=1 // pred_fallthru
      _
    // Predicated region
    $region42: #{tpu_custom_call.1} parent=1 // pred_check
      _
    $region43: #{tpu_custom_call.1} parent=1 // pred_check_branch
      %376 = sbr.rel (0) target = $region45
    $region44: #{tpu_custom_call.1} parent=1 // pred_region
      %378 = dma.done [#allocation3], 32
    $region45: #{tpu_custom_call.1} parent=1 // pred_fallthru
      _
    %379 = vsyncpa [#allocation3], 1

</llo_original>
